<compile_context>
chip_gen: v7x
topology: tpu7x:2x2x1
jax: 0.10.0
libtpu: 0.0.40
codegen_flags: <defaults>
</compile_context>

<pallas_src>
import functools
import math

import numpy as np
import jax
import jax.numpy as jnp
from jax import lax
from jax.experimental import pallas as pl
from jax.experimental.pallas import tpu as pltpu

_DTYPE = jnp.bfloat16                # activation / weight dtype (f32 accumulation)
_VMEM_LIMIT = 48 * 1024 * 1024       # safe on v5e/v6e (128 MiB) and v7x (64 MiB)


def _tile(dim, target, align):
    """Largest `align`-aligned divisor of `dim` that is <= target, or `dim` itself."""
    if dim <= target:
        return dim
    t = (target // align) * align
    while t >= align:
        if dim % t == 0:
            return t
        t -= align
    return dim  # fallback: no aligned divisor -> single full block


# ----------------------------- Pallas kernels -------------------------------

def _matmul_kernel(x_ref, w_ref, o_ref, acc_ref):
    """Tiled matmul with f32 accumulation over the K grid axis (axis 2)."""
    @pl.when(pl.program_id(2) == 0)
    def _():
        acc_ref[...] = jnp.zeros_like(acc_ref)

    acc_ref[...] += jnp.dot(x_ref[...], w_ref[...],
                            preferred_element_type=jnp.float32)

    @pl.when(pl.program_id(2) == pl.num_programs(2) - 1)
    def _():
        o_ref[...] = acc_ref[...].astype(o_ref.dtype)


def _norm_matmul_kernel(x_ref, g_ref, w_ref, o_ref, *, eps):
    """Fused RMSNorm (f32 stats) + matmul. Full hidden dim resident per row tile."""
    x = x_ref[...].astype(jnp.float32)
    var = jnp.mean(x * x, axis=-1, keepdims=True)
    xn = (x * lax.rsqrt(var + eps) * g_ref[...].astype(jnp.float32)).astype(w_ref.dtype)
    o_ref[...] = jnp.dot(xn, w_ref[...],
                         preferred_element_type=jnp.float32).astype(o_ref.dtype)


def _norm_mlp_kernel(x_ref, g_ref, wg_ref, wu_ref, wd_ref, o_ref, acc_ref, *, eps):
    """Fused RMSNorm + SwiGLU MLP, accumulated over intermediate-dim tiles (axis 1)."""
    @pl.when(pl.program_id(1) == 0)
    def _():
        acc_ref[...] = jnp.zeros_like(acc_ref)

    x = x_ref[...].astype(jnp.float32)
    var = jnp.mean(x * x, axis=-1, keepdims=True)
    xn = (x * lax.rsqrt(var + eps) * g_ref[...].astype(jnp.float32)).astype(wg_ref.dtype)

    gate = jnp.dot(xn, wg_ref[...], preferred_element_type=jnp.float32)
    gate = gate * jax.nn.sigmoid(gate)                      # SiLU
    up = jnp.dot(xn, wu_ref[...], preferred_element_type=jnp.float32)
    acc_ref[...] += jnp.dot((gate * up).astype(wd_ref.dtype), wd_ref[...],
                            preferred_element_type=jnp.float32)

    @pl.when(pl.program_id(1) == pl.num_programs(1) - 1)
    def _():
        o_ref[...] = acc_ref[...].astype(o_ref.dtype)


def _flash_attn_kernel(q_ref, k_ref, v_ref, o_ref, m_ref, l_ref, acc_ref, *, scale):
    """Causal flash attention; all heads of one batch element per block.

    Grid = (B, S/tq, S/tk); KV axis (2) is the online-softmax reduction axis.
    """
    qi = pl.program_id(1)
    ki = pl.program_id(2)
    tq = q_ref.shape[2]
    tk = k_ref.shape[2]

    @pl.when(ki == 0)
    def _():
        m_ref[...] = jnp.full(m_ref.shape, -jnp.inf, dtype=m_ref.dtype)
        l_ref[...] = jnp.zeros_like(l_ref)
        acc_ref[...] = jnp.zeros_like(acc_ref)

    # Skip key blocks that lie entirely in the causal future of this query block.
    @pl.when(ki * tk <= qi * tq + (tq - 1))
    def _():
        q = q_ref[...][0]                                   # (H, tq, Dh)
        k = k_ref[...][0]                                   # (H, tk, Dh)
        v = v_ref[...][0]                                   # (H, tk, Dh)
        s = jnp.einsum("hqd,hkd->hqk", q, k,
                       preferred_element_type=jnp.float32) * scale
        row = qi * tq + lax.broadcasted_iota(jnp.int32, (1, tq, tk), 1)
        col = ki * tk + lax.broadcasted_iota(jnp.int32, (1, tq, tk), 2)
        s = jnp.where(col <= row, s, -1e30)

        m_prev = m_ref[...]
        m_new = jnp.maximum(m_prev, jnp.max(s, axis=-1, keepdims=True))
        alpha = jnp.exp(m_prev - m_new)
        p = jnp.exp(s - m_new)
        l_ref[...] = alpha * l_ref[...] + jnp.sum(p, axis=-1, keepdims=True)
        acc_ref[...] = alpha * acc_ref[...] + jnp.einsum(
            "hqk,hkd->hqd", p.astype(v.dtype), v,
            preferred_element_type=jnp.float32)
        m_ref[...] = m_new

    @pl.when(ki == pl.num_programs(2) - 1)
    def _():
        inv_l = pl.reciprocal(l_ref[...], approx=True)      # EUP, frees VALU slots
        o_ref[...] = (acc_ref[...] * inv_l).astype(o_ref.dtype)[None]


def _hash_kernel(k_ref, r1_ref, r2_ref, pack_ref, o_ref):
    """get_hash_code: pack_bits( SiLU(k @ rot1) @ rot2 > 0 ), all heads batched.

    The bit packing is an exact f32 matmul with a [1 << (j % 8)] selector
    (kept f32 on purpose; do NOT move to bf16/MXU-int paths).
    """
    x = k_ref[...][0].astype(jnp.float32)                   # (H, ts, Dh)
    y = jnp.einsum("hsd,hde->hse", x, r1_ref[...],
                   preferred_element_type=jnp.float32)
    y = y * jax.nn.sigmoid(y)                               # `relu1` is nn.SiLU
    y = jnp.einsum("hsd,hde->hse", y, r2_ref[...],
                   preferred_element_type=jnp.float32)
    bits = (y > 0).astype(jnp.float32)                      # (H, ts, Dh) in {0,1}
    packed = jnp.einsum("hsd,hdb->hsb", bits, pack_ref[...],
                        preferred_element_type=jnp.float32)
    o_ref[...] = packed.astype(jnp.int32)[None]


# ----------------------------- kernel wrappers -------------------------------

def matmul(x, w, out_dtype=None, tm=256, tn=256, tk=512):
    M, K = x.shape
    _, N = w.shape
    out_dtype = out_dtype or x.dtype
    tm = _tile(M, tm, 8)
    tn = _tile(N, tn, 128)
    tk = _tile(K, tk, 128)
    return pl.pallas_call(
        _matmul_kernel,
        grid=(M // tm, N // tn, K // tk),
        in_specs=[pl.BlockSpec((tm, tk), lambda i, j, k: (i, k)),
                  pl.BlockSpec((tk, tn), lambda i, j, k: (k, j))],
        out_specs=pl.BlockSpec((tm, tn), lambda i, j, k: (i, j)),
        out_shape=jax.ShapeDtypeStruct((M, N), out_dtype),
        scratch_shapes=[pltpu.VMEM((tm, tn), jnp.float32)],
        compiler_params=pltpu.CompilerParams(
            dimension_semantics=("parallel", "parallel", "arbitrary"),
            vmem_limit_bytes=_VMEM_LIMIT),
    )(x, w)


def norm_matmul(x, gamma, w, eps=1e-6, out_dtype=None, tm=256, tn=256):
    """Fused RMSNorm(x) @ w; full hidden dim kept resident per row tile."""
    M, D = x.shape
    _, N = w.shape
    out_dtype = out_dtype or x.dtype
    tm = _tile(M, tm, 8)
    tn = _tile(N, tn, 128)
    return pl.pallas_call(
        functools.partial(_norm_matmul_kernel, eps=eps),
        grid=(M // tm, N // tn),
        in_specs=[pl.BlockSpec((tm, D), lambda i, j: (i, 0)),
                  pl.BlockSpec((1, D), lambda i, j: (0, 0)),
                  pl.BlockSpec((D, tn), lambda i, j: (0, j))],
        out_specs=pl.BlockSpec((tm, tn), lambda i, j: (i, j)),
        out_shape=jax.ShapeDtypeStruct((M, N), out_dtype),
        compiler_params=pltpu.CompilerParams(
            dimension_semantics=("parallel", "parallel"),
            vmem_limit_bytes=_VMEM_LIMIT),
    )(x, gamma.reshape(1, D), w)


def norm_mlp(x, gamma, wg, wu, wd, eps=1e-6, out_dtype=None, tm=256, ti=256):
    """Fused RMSNorm + SwiGLU MLP, tiled over rows and the intermediate dim."""
    M, D = x.shape
    _, I = wg.shape
    out_dtype = out_dtype or x.dtype
    tm = _tile(M, tm, 8)
    ti = _tile(I, ti, 128)
    return pl.pallas_call(
        functools.partial(_norm_mlp_kernel, eps=eps),
        grid=(M // tm, I // ti),
        in_specs=[pl.BlockSpec((tm, D), lambda i, j: (i, 0)),
                  pl.BlockSpec((1, D), lambda i, j: (0, 0)),
                  pl.BlockSpec((D, ti), lambda i, j: (0, j)),
                  pl.BlockSpec((D, ti), lambda i, j: (0, j)),
                  pl.BlockSpec((ti, D), lambda i, j: (j, 0))],
        out_specs=pl.BlockSpec((tm, D), lambda i, j: (i, 0)),
        out_shape=jax.ShapeDtypeStruct((M, D), out_dtype),
        scratch_shapes=[pltpu.VMEM((tm, D), jnp.float32)],
        compiler_params=pltpu.CompilerParams(
            dimension_semantics=("parallel", "arbitrary"),
            vmem_limit_bytes=_VMEM_LIMIT),
    )(x, gamma.reshape(1, D), wg, wu, wd)


def flash_attention(q, k, v, *, tq=128, tk=128):
    """Causal flash attention over (B, H, S, Dh); heads processed together."""
    B, H, S, Dh = q.shape
    scale = 1.0 / math.sqrt(Dh)
    tq = _tile(S, tq, 8)
    tk = _tile(S, tk, 8)
    q_spec = pl.BlockSpec((1, H, tq, Dh), lambda b, qi, ki: (b, 0, qi, 0))
    kv_spec = pl.BlockSpec((1, H, tk, Dh), lambda b, qi, ki: (b, 0, ki, 0))
    return pl.pallas_call(
        functools.partial(_flash_attn_kernel, scale=scale),
        grid=(B, S // tq, S // tk),
        in_specs=[q_spec, kv_spec, kv_spec],
        out_specs=pl.BlockSpec((1, H, tq, Dh), lambda b, qi, ki: (b, 0, qi, 0)),
        out_shape=jax.ShapeDtypeStruct((B, H, S, Dh), q.dtype),
        scratch_shapes=[pltpu.VMEM((H, tq, 1), jnp.float32),
                        pltpu.VMEM((H, tq, 1), jnp.float32),
                        pltpu.VMEM((H, tq, Dh), jnp.float32)],
        compiler_params=pltpu.CompilerParams(
            dimension_semantics=("parallel", "parallel", "arbitrary")),
    )(q, k, v)


def hash_code(k_rope, rot1, rot2, *, ts=256):
    """Packed uint8 hash codes of post-RoPE keys: (B, H, S, Dh//8)."""
    B, H, S, Dh = k_rope.shape
    nb = Dh // 8
    pack = np.zeros((Dh, nb), np.float32)
    for j in range(Dh):
        pack[j, j // 8] = float(1 << (j % 8))
    pack = jnp.asarray(np.tile(pack[None], (H, 1, 1)))       # (H, Dh, nb), f32
    ts = _tile(S, ts, 8)
    packed = pl.pallas_call(
        _hash_kernel,
        grid=(B, S // ts),
        in_specs=[pl.BlockSpec((1, H, ts, Dh), lambda b, s: (b, 0, s, 0)),
                  pl.BlockSpec((H, Dh, Dh), lambda b, s: (0, 0, 0)),
                  pl.BlockSpec((H, Dh, Dh), lambda b, s: (0, 0, 0)),
                  pl.BlockSpec((H, Dh, nb), lambda b, s: (0, 0, 0))],
        out_specs=pl.BlockSpec((1, H, ts, nb), lambda b, s: (b, 0, s, 0)),
        out_shape=jax.ShapeDtypeStruct((B, H, S, nb), jnp.int32),
        compiler_params=pltpu.CompilerParams(
            dimension_semantics=("parallel", "parallel")),
    )(k_rope, rot1, rot2, pack)
    # TODO(synk): emit uint8 (or uint32-packed) directly from the kernel to
    # drop this extra cast pass over the hash cache.
    return packed.astype(jnp.uint8)


# ------------------------------- glue (JAX) ----------------------------------

def rope_cos_sin(seq_len, dh, base=10000.0):
    inv_freq = 1.0 / (base ** (np.arange(0, dh, 2, dtype=np.float64) / dh))
    t = np.arange(seq_len, dtype=np.float64)
    freqs = np.outer(t, inv_freq)                  # (S, dh/2)
    emb = np.concatenate([freqs, freqs], axis=-1)  # (S, dh)
    return (jnp.asarray(np.cos(emb), jnp.float32),
            jnp.asarray(np.sin(emb), jnp.float32))


def rotate_half(x):
    x1, x2 = jnp.split(x, 2, axis=-1)
    return jnp.concatenate([-x2, x1], axis=-1)


def apply_rope(x, cos, sin):
    # x: (B, H, S, Dh); cos/sin: (S, Dh). Compute in f32, return in x.dtype.
    xf = x.astype(jnp.float32)
    out = xf * cos[None, None] + rotate_half(xf) * sin[None, None]
    return out.astype(x.dtype)


def random_rotation_matrices(num, dim, seed):
    rng = np.random.default_rng(seed)
    mats = []
    for _ in range(num):
        m = rng.standard_normal((dim, dim))
        q, _ = np.linalg.qr(m)
        if np.linalg.det(q) < 0:
            q[:, 0] *= -1
        mats.append(q)
    return jnp.asarray(np.stack(mats, axis=0), jnp.float32)   # (num, dim, dim)


def init_params(cfg, key):
    D, H, Dh, I, V, L = (cfg["hidden"], cfg["num_heads"], cfg["head_dim"],
                         cfg["intermediate"], cfg["vocab"], cfg["num_layers"])
    ks = jax.random.split(key, 2 + 5 * L)

    def w(k, shape):
        return (0.02 * jax.random.normal(k, shape, jnp.float32)).astype(_DTYPE)

    params = {
        "embed": w(ks[0], (V, D)),
        "lm_head": w(ks[1], (D, V)),
        "final_norm": jnp.ones((D,), _DTYPE),
        "layers": [],
    }
    for l in range(L):
        kk = ks[2 + 5 * l: 2 + 5 * (l + 1)]
        layer = {
            "ln1": jnp.ones((D,), _DTYPE),
            "ln2": jnp.ones((D,), _DTYPE),
            # q/k/v projections fused into a single (D, 3*H*Dh) weight [wq|wk|wv]
            "wqkv": w(kk[0], (D, 3 * H * Dh)),
            "wo": w(kk[1], (H * Dh, D)),
            "wg": w(kk[2], (D, I)),
            "wu": w(kk[3], (D, I)),
            "wd": w(kk[4], (I, D)),
            # per-head random rotation matrices (rot_mat1 / rot_mat2), kept f32
            "rot1": random_rotation_matrices(H, Dh, seed=1000 + l),
            "rot2": random_rotation_matrices(H, Dh, seed=2000 + l),
        }
        params["layers"].append(layer)
    return params


def decoder_layer_forward(h, layer, cos, sin, cfg):
    B, S, D = h.shape
    H, Dh = cfg["num_heads"], cfg["head_dim"]

    # ---- self attention block (input_layernorm fused into the QKV matmul) ----
    residual = h
    qkv = norm_matmul(h.reshape(B * S, D), layer["ln1"], layer["wqkv"])
    qkv = qkv.reshape(B, S, 3, H, Dh).transpose(2, 0, 3, 1, 4)   # (3, B, H, S, Dh)
    q, k, v = qkv[0], qkv[1], qkv[2]
    q = apply_rope(q, cos, sin)
    k = apply_rope(k, cos, sin)

    # prefill: hash codes of post-RoPE keys (draft enabled, not a fixed layer)
    k_hash = hash_code(k, layer["rot1"], layer["rot2"])
    kv_cache = (k, v)
    # num_kv_heads == num_heads here, so repeat_kv is the identity.

    attn = flash_attention(q, k, v)                              # (B, H, S, Dh)
    attn = attn.transpose(0, 2, 1, 3).reshape(B * S, H * Dh)
    h = residual + matmul(attn, layer["wo"]).reshape(B, S, D)

    # ---- MLP block (post_attention_layernorm fused into the MLP kernel) ----
    residual = h
    h = residual + norm_mlp(h.reshape(B * S, D), layer["ln2"],
                            layer["wg"], layer["wu"], layer["wd"]).reshape(B, S, D)
    return h, kv_cache, k_hash


def model_forward(params, input_ids, cfg):
    """Prefill forward: returns (logits, kv_cache list, k_hash_cache list)."""
    B, S = input_ids.shape
    D, Dh, V = cfg["hidden"], cfg["head_dim"], cfg["vocab"]
    cos, sin = rope_cos_sin(S, Dh)

    h = jnp.take(params["embed"], input_ids, axis=0)             # (B, S, D) bf16
    kv_cache, k_hash_cache = [], []
    for layer in params["layers"]:
        h, kv, kh = decoder_layer_forward(h, layer, cos, sin, cfg)
        kv_cache.append(kv)
        k_hash_cache.append(kh)

    # final norm fused into lm_head; logits in f32 as in the reference (.float())
    logits = norm_matmul(h.reshape(B * S, D), params["final_norm"],
                         params["lm_head"], out_dtype=jnp.float32)
    logits = logits.reshape(B, S, V)
    return logits, kv_cache, k_hash_cache


# --------------------------------- main --------------------------------------

if __name__ == "__main__":
    cfg = dict(hidden=64, num_heads=4, head_dim=16, intermediate=128,
               vocab=256, num_layers=2)

    key = jax.random.PRNGKey(0)
    pkey, ikey = jax.random.split(key)
    params = init_params(cfg, pkey)

    B, S = 2, 8
    input_ids = jax.random.randint(ikey, (B, S), 0, cfg["vocab"], dtype=jnp.int32)

    # --- quick numerical sanity check: flash attention vs plain-JAX reference ---
    H, Dh = cfg["num_heads"], cfg["head_dim"]
    qt = jax.random.normal(jax.random.PRNGKey(1), (B, H, S, Dh), jnp.float32).astype(_DTYPE)
    kt = jax.random.normal(jax.random.PRNGKey(2), (B, H, S, Dh), jnp.float32).astype(_DTYPE)
    vt = jax.random.normal(jax.random.PRNGKey(3), (B, H, S, Dh), jnp.float32).astype(_DTYPE)
    got = flash_attention(qt, kt, vt).astype(jnp.float32)
    sc = jnp.einsum("bhqd,bhkd->bhqk", qt.astype(jnp.float32),
                    kt.astype(jnp.float32)) / math.sqrt(Dh)
    sc = jnp.where(jnp.tril(jnp.ones((S, S), bool))[None, None], sc, -jnp.inf)
    ref = jnp.einsum("bhqk,bhkd->bhqd", jax.nn.softmax(sc, axis=-1),
                     vt.astype(jnp.float32))
    assert float(jnp.max(jnp.abs(got - ref))) < 0.1

    # --- full prefill forward ---
    logits, kv_cache, k_hash_cache = model_forward(params, input_ids, cfg)
    jax.block_until_ready(logits)
    jax.block_until_ready(kv_cache)
    jax.block_until_ready(k_hash_cache)

    assert logits.shape == (B, S, cfg["vocab"]) and logits.dtype == jnp.float32
    assert bool(jnp.isfinite(logits).all())
    assert kv_cache[0][0].shape == (B, cfg["num_heads"], S, cfg["head_dim"])
    assert k_hash_cache[0].shape == (B, cfg["num_heads"], S, cfg["head_dim"] // 8)
    assert k_hash_cache[0].dtype == jnp.uint8
    print("KERNEL_OK")
</pallas_src>

<mosaic_0001>
module attributes {stable_mosaic.version = 11 : i64} {
  func.func @_flash_attn_kernel(%arg0: i32, %arg1: i32, %arg2: i32, %arg3: memref<1x4x8x16xbf16, #tpu.memory_space<vmem>>, %arg4: memref<1x4x8x16xbf16, #tpu.memory_space<vmem>>, %arg5: memref<1x4x8x16xbf16, #tpu.memory_space<vmem>>, %arg6: memref<1x4x8x16xbf16, #tpu.memory_space<vmem>>, %arg7: memref<4x8x1xf32, #tpu.memory_space<vmem>>, %arg8: memref<4x8x1xf32, #tpu.memory_space<vmem>>, %arg9: memref<4x8x16xf32, #tpu.memory_space<vmem>>) attributes {dimension_semantics = [#tpu.dimension_semantics<parallel>, #tpu.dimension_semantics<parallel>, #tpu.dimension_semantics<arbitrary>], iteration_bounds = array<i64: 2, 1, 1>, scalar_prefetch = 0 : i64, scratch_operands = 3 : i64, tpu.core_type = #tpu.core_type<tc>, window_params = [{transform_indices = @transform_0, window_bounds = array<i64: 1, 4, 8, 16>}, {transform_indices = @transform_1, window_bounds = array<i64: 1, 4, 8, 16>}, {transform_indices = @transform_2, window_bounds = array<i64: 1, 4, 8, 16>}, {transform_indices = @transform_3, window_bounds = array<i64: 1, 4, 8, 16>}]} {
    %c0_i32 = arith.constant 0 : i32
    %0 = arith.cmpi eq, %arg2, %c0_i32 : i32
    %1 = arith.extui %0 : i1 to i32
    %c0_i32_0 = arith.constant 0 : i32
    %2 = arith.cmpi ne, %1, %c0_i32_0 : i32
    scf.if %2 {
      %cst = arith.constant 0xFF800000 : f32
      %12 = vector.broadcast %cst : f32 to vector<4x8x1xf32>
      %c0 = arith.constant 0 : index
      %c0_5 = arith.constant 0 : index
      %c0_6 = arith.constant 0 : index
      %13 = vector.load %arg7[%c0, %c0_5, %c0_6] : memref<4x8x1xf32, #tpu.memory_space<vmem>>, vector<4x8x1xf32>
      tpu.vector_store %arg7[%c0, %c0_5, %c0_6], %12 {strides = array<i32>} : memref<4x8x1xf32, #tpu.memory_space<vmem>>, vector<4x8x1xf32>,
      %cst_7 = arith.constant 0.000000e+00 : f32
      %14 = vector.broadcast %cst_7 : f32 to vector<4x8x1xf32>
      %c0_8 = arith.constant 0 : index
      %c0_9 = arith.constant 0 : index
      %c0_10 = arith.constant 0 : index
      %15 = vector.load %arg8[%c0_8, %c0_9, %c0_10] : memref<4x8x1xf32, #tpu.memory_space<vmem>>, vector<4x8x1xf32>
      tpu.vector_store %arg8[%c0_8, %c0_9, %c0_10], %14 {strides = array<i32>} : memref<4x8x1xf32, #tpu.memory_space<vmem>>, vector<4x8x1xf32>,
      %cst_11 = arith.constant 0.000000e+00 : f32
      %16 = vector.broadcast %cst_11 : f32 to vector<4x8x16xf32>
      %c0_12 = arith.constant 0 : index
      %c0_13 = arith.constant 0 : index
      %c0_14 = arith.constant 0 : index
      %17 = vector.load %arg9[%c0_12, %c0_13, %c0_14] : memref<4x8x16xf32, #tpu.memory_space<vmem>>, vector<4x8x16xf32>
      tpu.vector_store %arg9[%c0_12, %c0_13, %c0_14], %16 {strides = array<i32>} : memref<4x8x16xf32, #tpu.memory_space<vmem>>, vector<4x8x16xf32>,
    } else {
    }
    %c8_i32 = arith.constant 8 : i32
    %3 = arith.muli %arg2, %c8_i32 : i32
    %c8_i32_1 = arith.constant 8 : i32
    %4 = arith.muli %arg1, %c8_i32_1 : i32
    %c7_i32 = arith.constant 7 : i32
    %5 = arith.addi %4, %c7_i32 : i32
    %6 = arith.cmpi sle, %3, %5 : i32
    %7 = arith.extui %6 : i1 to i32
    %c0_i32_2 = arith.constant 0 : i32
    %8 = arith.cmpi ne, %7, %c0_i32_2 : i32
    scf.if %8 {
      %c0 = arith.constant 0 : index
      %c0_5 = arith.constant 0 : index
      %c0_6 = arith.constant 0 : index
      %c0_7 = arith.constant 0 : index
      %12 = vector.load %arg3[%c0, %c0_5, %c0_6, %c0_7] : memref<1x4x8x16xbf16, #tpu.memory_space<vmem>>, vector<1x4x8x16xbf16>
      %13 = vector.shape_cast %12 : vector<1x4x8x16xbf16> to vector<4x8x16xbf16>
      %c0_8 = arith.constant 0 : index
      %c0_9 = arith.constant 0 : index
      %c0_10 = arith.constant 0 : index
      %c0_11 = arith.constant 0 : index
      %14 = vector.load %arg4[%c0_8, %c0_9, %c0_10, %c0_11] : memref<1x4x8x16xbf16, #tpu.memory_space<vmem>>, vector<1x4x8x16xbf16>
      %15 = vector.shape_cast %14 : vector<1x4x8x16xbf16> to vector<4x8x16xbf16>
      %c0_12 = arith.constant 0 : index
      %c0_13 = arith.constant 0 : index
      %c0_14 = arith.constant 0 : index
      %c0_15 = arith.constant 0 : index
      %16 = vector.load %arg5[%c0_12, %c0_13, %c0_14, %c0_15] : memref<1x4x8x16xbf16, #tpu.memory_space<vmem>>, vector<1x4x8x16xbf16>
      %17 = vector.shape_cast %16 : vector<1x4x8x16xbf16> to vector<4x8x16xbf16>
      "tpu.trace_start"() <{level = 10 : i32, message = "hqd,hkd->hqk"}> : () -> ()
      %cst = arith.constant dense<0.000000e+00> : vector<4x8x8xf32>
      %18 = tpu.matmul %13, %15, %cst {dimension_numbers = #tpu.dot_dimension_numbers<[2], [2], [1], [1], [0, 0, 0, 1, 1, 1], [0], [0]>} : vector<4x8x16xbf16>, vector<4x8x16xbf16>, vector<4x8x8xf32> -> vector<4x8x8xf32>
      "tpu.trace_stop"() : () -> ()
      %cst_16 = arith.constant 2.500000e-01 : f32
      %19 = vector.broadcast %cst_16 : f32 to vector<4x8x8xf32>
      %20 = arith.mulf %18, %19 : vector<4x8x8xf32>
      %c8_i32_17 = arith.constant 8 : i32
      %21 = arith.muli %arg1, %c8_i32_17 : i32
      %22 = tpu.iota {dimensions = array<i32: 1>} : vector<1x8x8xi32>
      %23 = vector.broadcast %21 : i32 to vector<1x8x8xi32>
      %24 = arith.addi %23, %22 : vector<1x8x8xi32>
      %c8_i32_18 = arith.constant 8 : i32
      %25 = arith.muli %arg2, %c8_i32_18 : i32
      %26 = tpu.iota {dimensions = array<i32: 2>} : vector<1x8x8xi32>
      %27 = vector.broadcast %25 : i32 to vector<1x8x8xi32>
      %28 = arith.addi %27, %26 : vector<1x8x8xi32>
      %29 = arith.cmpi sle, %28, %24 : vector<1x8x8xi32>
      %cst_19 = arith.constant -1.000000e+30 : f32
      %30 = vector.shape_cast %29 : vector<1x8x8xi1> to vector<1x8x8xi1>
      %31 = vector.broadcast %30 : vector<1x8x8xi1> to vector<4x8x8xi1>
      %32 = vector.broadcast %cst_19 : f32 to vector<4x8x8xf32>
      %33 = arith.select %31, %20, %32 : vector<4x8x8xi1>, vector<4x8x8xf32>
      %c0_20 = arith.constant 0 : index
      %c0_21 = arith.constant 0 : index
      %c0_22 = arith.constant 0 : index
      %34 = vector.load %arg7[%c0_20, %c0_21, %c0_22] : memref<4x8x1xf32, #tpu.memory_space<vmem>>, vector<4x8x1xf32>
      %cst_23 = arith.constant dense<0xFF800000> : vector<4x8xf32>
      %35 = vector.multi_reduction <maximumf>, %33, %cst_23 [2] : vector<4x8x8xf32> to vector<4x8xf32>
      %36 = vector.shape_cast %35 : vector<4x8xf32> to vector<4x8x1xf32>
      %37 = arith.maximumf %34, %36 : vector<4x8x1xf32>
      %38 = arith.subf %34, %37 : vector<4x8x1xf32>
      %39 = math.exp %38 : vector<4x8x1xf32>
      %40 = vector.broadcast %37 : vector<4x8x1xf32> to vector<4x8x8xf32>
      %41 = arith.subf %33, %40 : vector<4x8x8xf32>
      %42 = math.exp %41 : vector<4x8x8xf32>
      %c0_24 = arith.constant 0 : index
      %c0_25 = arith.constant 0 : index
      %c0_26 = arith.constant 0 : index
      %43 = vector.load %arg8[%c0_24, %c0_25, %c0_26] : memref<4x8x1xf32, #tpu.memory_space<vmem>>, vector<4x8x1xf32>
      %44 = arith.mulf %39, %43 : vector<4x8x1xf32>
      %cst_27 = arith.constant dense<0.000000e+00> : vector<4x8xf32>
      %45 = vector.multi_reduction <add>, %42, %cst_27 [2] : vector<4x8x8xf32> to vector<4x8xf32>
      %46 = vector.shape_cast %45 : vector<4x8xf32> to vector<4x8x1xf32>
      %47 = arith.addf %44, %46 : vector<4x8x1xf32>
      %c0_28 = arith.constant 0 : index
      %c0_29 = arith.constant 0 : index
      %c0_30 = arith.constant 0 : index
      %48 = vector.load %arg8[%c0_28, %c0_29, %c0_30] : memref<4x8x1xf32, #tpu.memory_space<vmem>>, vector<4x8x1xf32>
      tpu.vector_store %arg8[%c0_28, %c0_29, %c0_30], %47 {strides = array<i32>} : memref<4x8x1xf32, #tpu.memory_space<vmem>>, vector<4x8x1xf32>,
      %c0_31 = arith.constant 0 : index
      %c0_32 = arith.constant 0 : index
      %c0_33 = arith.constant 0 : index
      %49 = vector.load %arg9[%c0_31, %c0_32, %c0_33] : memref<4x8x16xf32, #tpu.memory_space<vmem>>, vector<4x8x16xf32>
      %50 = vector.broadcast %39 : vector<4x8x1xf32> to vector<4x8x16xf32>
      %51 = arith.mulf %50, %49 : vector<4x8x16xf32>
      %52 = arith.truncf %42 : vector<4x8x8xf32> to vector<4x8x8xbf16>
      "tpu.trace_start"() <{level = 10 : i32, message = "hqk,hkd->hqd"}> : () -> ()
      %cst_34 = arith.constant dense<0.000000e+00> : vector<4x8x16xf32>
      %53 = tpu.matmul %52, %17, %cst_34 {dimension_numbers = #tpu.dot_dimension_numbers<[2], [1], [1], [2], [0, 0, 0, 1, 1, 2], [0], [0]>} : vector<4x8x8xbf16>, vector<4x8x16xbf16>, vector<4x8x16xf32> -> vector<4x8x16xf32>
      "tpu.trace_stop"() : () -> ()
      %54 = arith.addf %51, %53 : vector<4x8x16xf32>
      %c0_35 = arith.constant 0 : index
      %c0_36 = arith.constant 0 : index
      %c0_37 = arith.constant 0 : index
      %55 = vector.load %arg9[%c0_35, %c0_36, %c0_37] : memref<4x8x16xf32, #tpu.memory_space<vmem>>, vector<4x8x16xf32>
      tpu.vector_store %arg9[%c0_35, %c0_36, %c0_37], %54 {strides = array<i32>} : memref<4x8x16xf32, #tpu.memory_space<vmem>>, vector<4x8x16xf32>,
      %c0_38 = arith.constant 0 : index
      %c0_39 = arith.constant 0 : index
      %c0_40 = arith.constant 0 : index
      %56 = vector.load %arg7[%c0_38, %c0_39, %c0_40] : memref<4x8x1xf32, #tpu.memory_space<vmem>>, vector<4x8x1xf32>
      tpu.vector_store %arg7[%c0_38, %c0_39, %c0_40], %37 {strides = array<i32>} : memref<4x8x1xf32, #tpu.memory_space<vmem>>, vector<4x8x1xf32>,
    } else {
    }
    %c0_i32_3 = arith.constant 0 : i32
    %9 = arith.cmpi eq, %arg2, %c0_i32_3 : i32
    %10 = arith.extui %9 : i1 to i32
    %c0_i32_4 = arith.constant 0 : i32
    %11 = arith.cmpi ne, %10, %c0_i32_4 : i32
    scf.if %11 {
      %c0 = arith.constant 0 : index
      %c0_5 = arith.constant 0 : index
      %c0_6 = arith.constant 0 : index
      %12 = vector.load %arg8[%c0, %c0_5, %c0_6] : memref<4x8x1xf32, #tpu.memory_space<vmem>>, vector<4x8x1xf32>
      %13 = tpu.reciprocal %12 {approx = true} : vector<4x8x1xf32> -> vector<4x8x1xf32>
      %c0_7 = arith.constant 0 : index
      %c0_8 = arith.constant 0 : index
      %c0_9 = arith.constant 0 : index
      %14 = vector.load %arg9[%c0_7, %c0_8, %c0_9] : memref<4x8x16xf32, #tpu.memory_space<vmem>>, vector<4x8x16xf32>
      %15 = vector.broadcast %13 : vector<4x8x1xf32> to vector<4x8x16xf32>
      %16 = arith.mulf %14, %15 : vector<4x8x16xf32>
      %17 = arith.truncf %16 : vector<4x8x16xf32> to vector<4x8x16xbf16>
      %18 = vector.shape_cast %17 : vector<4x8x16xbf16> to vector<1x4x8x16xbf16>
      %c0_10 = arith.constant 0 : index
      %c0_11 = arith.constant 0 : index
      %c0_12 = arith.constant 0 : index
      %c0_13 = arith.constant 0 : index
      %19 = vector.load %arg6[%c0_10, %c0_11, %c0_12, %c0_13] : memref<1x4x8x16xbf16, #tpu.memory_space<vmem>>, vector<1x4x8x16xbf16>
      tpu.vector_store %arg6[%c0_10, %c0_11, %c0_12, %c0_13], %18 {strides = array<i32>} : memref<1x4x8x16xbf16, #tpu.memory_space<vmem>>, vector<1x4x8x16xbf16>,
    } else {
    }
    return
  }
  func.func @transform_0(%arg0: i32, %arg1: i32, %arg2: i32) -> (i32, i32, i32, i32) {
    %c0_i32 = arith.constant 0 : i32
    %c0_i32_0 = arith.constant 0 : i32
    %c0_i32_1 = arith.constant 0 : i32
    return %arg0, %c0_i32, %arg1, %c0_i32_0 : i32, i32, i32, i32
  }
  func.func @transform_1(%arg0: i32, %arg1: i32, %arg2: i32) -> (i32, i32, i32, i32) {
    %c0_i32 = arith.constant 0 : i32
    %c0_i32_0 = arith.constant 0 : i32
    %c0_i32_1 = arith.constant 0 : i32
    return %arg0, %c0_i32, %arg2, %c0_i32_0 : i32, i32, i32, i32
  }
  func.func @transform_2(%arg0: i32, %arg1: i32, %arg2: i32) -> (i32, i32, i32, i32) {
    %c0_i32 = arith.constant 0 : i32
    %c0_i32_0 = arith.constant 0 : i32
    %c0_i32_1 = arith.constant 0 : i32
    return %arg0, %c0_i32, %arg2, %c0_i32_0 : i32, i32, i32, i32
  }
  func.func @transform_3(%arg0: i32, %arg1: i32, %arg2: i32) -> (i32, i32, i32, i32) {
    %c0_i32 = arith.constant 0 : i32
    %c0_i32_0 = arith.constant 0 : i32
    %c0_i32_1 = arith.constant 0 : i32
    return %arg0, %c0_i32, %arg1, %c0_i32_0 : i32, i32, i32, i32
  }
}

</mosaic_0001>

<llo_original>
// kernel: tpu_custom_call.1
$region0: #{tpu_custom_call.1}
  #allocation0 [shape = 'u32[]', space=smem, size = 0x4, offset = 0x4, fixed_abs, tag = 'smem constant byte address 0x4 - core index']
  #allocation1 [shape = 'u32[144,128]{1,0:T(1,128)}', space=vmem, size = 0x12000, scoped, tag = 'internal scratch']
  #allocation2 [shape = 'f32[4,8,1]{2,1,0:T(8,128)}', space=vmem, size = 0x4000, scoped, tag = 'scratch operand']
  #allocation3 [shape = 'f32[4,8,1]{2,1,0:T(8,128)}', space=vmem, size = 0x4000, scoped, tag = 'scratch operand']
  #allocation4 [shape = 'f32[4,8,16]{2,1,0:T(8,128)}', space=vmem, size = 0x4000, scoped, tag = 'scratch operand']
  %s0 = inlined_call_operand.hbm [shape: bf16[2,4,8,16], index: 0, kind: input, shape index: {}]
  %s1 = inlined_call_operand.hbm [shape: bf16[2,4,8,16], index: 1, kind: input, shape index: {}]
  %s2 = inlined_call_operand.hbm [shape: bf16[2,4,8,16], index: 2, kind: input, shape index: {}]
  %s3 = inlined_call_operand.hbm [shape: bf16[2,4,8,16], index: 3, kind: output, shape index: {}]
  %s4 = sld [smem:[#allocation0]]
  $region69: #{tpu_custom_call.1} parent=0
    _
  %s6 = ssub.s32 1, %s4
  %s7 = scalar_select 0, %s6, %s4
  $region1: #{tpu_custom_call.1} parent=0
    #allocation5 [shape = 'u8[16384]{0}', space=vmem, size = 0x4000, scoped, tag = 'input window, operand 0']
    #allocation6 [shape = 's32[2]{0}', space=sflag, size = 0x8, scoped, tag = 'scoped memory for tpu_custom_call.1']
    #allocation7 [shape = 's32[2]{0}', space=sflag, size = 0x8, scoped, tag = 'scoped memory for tpu_custom_call.1']
    #allocation8 [shape = 'u8[16384]{0}', space=vmem, size = 0x4000, scoped, tag = 'input window, operand 1']
    #allocation9 [shape = 's32[2]{0}', space=sflag, size = 0x8, scoped, tag = 'scoped memory for tpu_custom_call.1']
    #allocation10 [shape = 'u8[16384]{0}', space=vmem, size = 0x4000, scoped, tag = 'input window, operand 2']
    #allocation11 [shape = 'u8[16384]{0}', space=vmem, size = 0x4000, scoped, tag = 'output window, operand 0']
    %8 = vsyncpa [#allocation6], 0
    %s9 = scalar_lea.sflag [#allocation6], 1
    %10 = vsyncpa %s9, 0
    %11 = vsyncpa [#allocation9], 0
    %s12 = scalar_lea.sflag [#allocation9], 1
    %13 = vsyncpa %s12, 0
    %14 = vsyncpa [#allocation7], 0
    %s15 = scalar_lea.sflag [#allocation7], 1
    %16 = vsyncpa %s15, 0
    loop: start=0, step=1, limit=4
    $region2: #{tpu_custom_call.1} parent=1 // loop_pre_header
      _
    $region3: #{tpu_custom_call.1} parent=1 // loop_header
      %s18 = sphi 0, %s22
      %p19 = scmp.ge.s32.totalorder %s18, 4
      %s25 = sphi 0, %s44
      %s26 = sphi 0, %s40
      %s27 = sphi 0, %s36
      %s28 = sphi 0, %s25
      %s29 = sphi 0, %s26
      %s30 = sphi 0, %s27
      %s31 = sphi 0, %s28
      %s32 = sphi 0, %s29
      %s33 = sphi 0, %s30
      %s49 = sphi 0, %s51
      %s52 = sphi 0, %s49
      %s53 = sphi 0, %s52
      %s69 = sphi 0, %s53
      %s77 = sphi 0, %s79
      %s80 = sphi 0, %s77
      %s81 = sphi 0, %s80
      %s97 = sphi 0, %s81
      %s105 = sphi 0, %s107
      %s108 = sphi 0, %s105
      %s109 = sphi 0, %s108
      %s125 = sphi 0, %s109
      %s133 = sphi 0, %s135
      %s136 = sphi 0, %s133
      %s137 = sphi 0, %s136
      %s153 = sphi 0, %s137
    $region4: #{tpu_custom_call.1} parent=1 // loop_header_branch
      %21 = sbr.rel (%p19) target = $region8
    $region5: #{tpu_custom_call.1} parent=1 // loop_body
      %s23 = ssub.s32 %s18, 1
      %s24 = ssub.s32 %s18, 2
      %s34 = sadd.s32 1, %s27
      %p35 = scmp.ge.s32.totalorder %s34, 1
      %s36 = scalar_select %p35, 0, %s34
      %s37 = sadd.s32 1, %s26
      %s38 = scalar_select %p35, %s37, %s26
      %p39 = scmp.ge.s32.totalorder %s38, 1
      %s40 = scalar_select %p39, 0, %s38
      %s41 = sadd.s32 1, %s25
      %s42 = scalar_select %p39, %s41, %s25
      %p43 = scmp.ge.s32.totalorder %s42, 2
      %s44 = scalar_select %p43, 0, %s42
      %s45 = ssub.s32 %s25, %s44
      %s46 = ssub.s32 %s26, %s40
      %s47 = sor.u32 %s45, %s46
      %p48 = scmp.eq.s32.totalorder %s47, 0
      %s50 = sadd.s32 %s49, 1
      %s51 = scalar_select %p48, %s49, %s50
      %p54 = pneg %p48
      %p55 = scmp.eq.s32.totalorder %s18, 1
      %p56 = por %p54, %p55
      %p57 = scmp.ne.s32.totalorder %s49, %s52
      %p58 = scmp.eq.s32.totalorder %s18, 0
      %p59 = por %p57, %p58
      %p60 = scmp.ne.s32.totalorder %s49, %s52
      %p61 = scmp.eq.s32.totalorder %s23, 1
      %p62 = por %p60, %p61
      %p63 = scmp.ne.s32.totalorder %s52, %s53
      %p64 = scmp.eq.s32.totalorder %s23, 0
      %p65 = por %p63, %p64
      %p66 = scmp.ne.s32.totalorder %s52, %s53
      %p67 = scmp.eq.s32.totalorder %s24, 1
      %p68 = por %p66, %p67
      %p70 = scmp.ne.s32.totalorder %s53, %s69
      %p71 = scmp.eq.s32.totalorder %s24, 0
      %p72 = por %p70, %p71
      %s73 = ssub.s32 %s25, %s44
      %s74 = ssub.s32 %s27, %s36
      %s75 = sor.u32 %s73, %s74
      %p76 = scmp.eq.s32.totalorder %s75, 0
      %s78 = sadd.s32 %s77, 1
      %s79 = scalar_select %p76, %s77, %s78
      %p82 = pneg %p76
      %p83 = scmp.eq.s32.totalorder %s18, 1
      %p84 = por %p82, %p83
      %p85 = scmp.ne.s32.totalorder %s77, %s80
      %p86 = scmp.eq.s32.totalorder %s18, 0
      %p87 = por %p85, %p86
      %p88 = scmp.ne.s32.totalorder %s77, %s80
      %p89 = scmp.eq.s32.totalorder %s23, 1
      %p90 = por %p88, %p89
      %p91 = scmp.ne.s32.totalorder %s80, %s81
      %p92 = scmp.eq.s32.totalorder %s23, 0
      %p93 = por %p91, %p92
      %p94 = scmp.ne.s32.totalorder %s80, %s81
      %p95 = scmp.eq.s32.totalorder %s24, 1
      %p96 = por %p94, %p95
      %p98 = scmp.ne.s32.totalorder %s81, %s97
      %p99 = scmp.eq.s32.totalorder %s24, 0
      %p100 = por %p98, %p99
      %s101 = ssub.s32 %s25, %s44
      %s102 = ssub.s32 %s27, %s36
      %s103 = sor.u32 %s101, %s102
      %p104 = scmp.eq.s32.totalorder %s103, 0
      %s106 = sadd.s32 %s105, 1
      %s107 = scalar_select %p104, %s105, %s106
      %p110 = pneg %p104
      %p111 = scmp.eq.s32.totalorder %s18, 1
      %p112 = por %p110, %p111
      %p113 = scmp.ne.s32.totalorder %s105, %s108
      %p114 = scmp.eq.s32.totalorder %s18, 0
      %p115 = por %p113, %p114
      %p116 = scmp.ne.s32.totalorder %s105, %s108
      %p117 = scmp.eq.s32.totalorder %s23, 1
      %p118 = por %p116, %p117
      %p119 = scmp.ne.s32.totalorder %s108, %s109
      %p120 = scmp.eq.s32.totalorder %s23, 0
      %p121 = por %p119, %p120
      %p122 = scmp.ne.s32.totalorder %s108, %s109
      %p123 = scmp.eq.s32.totalorder %s24, 1
      %p124 = por %p122, %p123
      %p126 = scmp.ne.s32.totalorder %s109, %s125
      %p127 = scmp.eq.s32.totalorder %s24, 0
      %p128 = por %p126, %p127
      %s129 = ssub.s32 %s25, %s44
      %s130 = ssub.s32 %s26, %s40
      %s131 = sor.u32 %s129, %s130
      %p132 = scmp.eq.s32.totalorder %s131, 0
      %s134 = sadd.s32 %s133, 1
      %s135 = scalar_select %p132, %s133, %s134
      %p138 = pneg %p132
      %p139 = scmp.eq.s32.totalorder %s18, 1
      %p140 = por %p138, %p139
      %p141 = scmp.ne.s32.totalorder %s133, %s136
      %p142 = scmp.eq.s32.totalorder %s18, 0
      %p143 = por %p141, %p142
      %p144 = scmp.ne.s32.totalorder %s133, %s136
      %p145 = scmp.eq.s32.totalorder %s23, 1
      %p146 = por %p144, %p145
      %p147 = scmp.ne.s32.totalorder %s136, %s137
      %p148 = scmp.eq.s32.totalorder %s23, 0
      %p149 = por %p147, %p148
      %p150 = scmp.ne.s32.totalorder %s136, %s137
      %p151 = scmp.eq.s32.totalorder %s24, 1
      %p152 = por %p150, %p151
      %p154 = scmp.ne.s32.totalorder %s137, %s153
      %p155 = scmp.eq.s32.totalorder %s24, 0
      %p156 = por %p154, %p155
      %p157 = scmp.le.s32.totalorder 1, %s18
      %p158 = scmp.lt.s32.totalorder %s18, 3
      %p159 = pnand %p157, %p158
      %p160 = pneg %p159
      // Predicated region
      $region9: #{tpu_custom_call.1} parent=5 // pred_check
        _
      $region10: #{tpu_custom_call.1} parent=5 // pred_check_branch
        %162 = sbr.rel (%p159) target = $region12
      $region11: #{tpu_custom_call.1} parent=5 // pred_region
        %s163 = ssub.s32 %s18, 1
      $region12: #{tpu_custom_call.1} parent=5 // pred_fallthru
        _
      %p164 = scmp.lt.s32.totalorder %s18, 2
      // Predicated region
      $region13: #{tpu_custom_call.1} parent=5 // pred_check
        %p165 = pneg %p164
      $region14: #{tpu_custom_call.1} parent=5 // pred_check_branch
        %167 = sbr.rel (%p165) target = $region16
      $region15: #{tpu_custom_call.1} parent=5 // pred_region
        // Predicated region
        $region17: #{tpu_custom_call.1} parent=15 // pred_check
          %p168 = pneg %p59
        $region18: #{tpu_custom_call.1} parent=15 // pred_check_branch
          %170 = sbr.rel (%p168) target = $region20
        $region19: #{tpu_custom_call.1} parent=15 // pred_region
          %s171 = sand.u32 %s49, 1
          %s172 = scalar_lea.sflag [#allocation6], %s171
          %s173 = sand.u32 %s49, 1
          %s174 = smul.addr %s173, 16
          %s175 = scalar_lea.vmem [#allocation5], %s174
          %s177 = ssub.s32 256, 256
          %178 = vsyncadd %s172, %s177
          %s179 = smul.addr %s25, 4
          %s180 = sadd.s32 %s26, %s179
          %s181 = smul.addr %s180, 64
          %s182 = scalar_lea.hbm %s0, %s181
          %s183 = sshll.u32 %s175, 4
          %s184 = int_to_ptr.vmem [resolvable:$true] %s183
          %189 = dma.hbm_to_vmem [thread:$0]  %s182, 256, %s184, %s172, 64, 64, 4
        $region20: #{tpu_custom_call.1} parent=15 // pred_fallthru
          _
        // Predicated region
        $region21: #{tpu_custom_call.1} parent=15 // pred_check
          %p190 = pneg %p87
        $region22: #{tpu_custom_call.1} parent=15 // pred_check_branch
          %192 = sbr.rel (%p190) target = $region24
        $region23: #{tpu_custom_call.1} parent=15 // pred_region
          %s193 = sand.u32 %s18, 1
          %s194 = scalar_lea.sflag [#allocation9], %s193
          %s195 = sand.u32 %s77, 1
          %s196 = smul.addr %s195, 16
          %s197 = scalar_lea.vmem [#allocation8], %s196
          %s199 = ssub.s32 256, 256
          %200 = vsyncadd %s194, %s199
          %s201 = smul.addr %s25, 4
          %s202 = sadd.s32 %s27, %s201
          %s203 = smul.addr %s202, 64
          %s204 = scalar_lea.hbm %s1, %s203
          %s205 = sshll.u32 %s197, 4
          %s206 = int_to_ptr.vmem [resolvable:$true] %s205
          %211 = dma.hbm_to_vmem [thread:$0]  %s204, 256, %s206, %s194, 64, 64, 4
        $region24: #{tpu_custom_call.1} parent=15 // pred_fallthru
          _
        // Predicated region
        $region25: #{tpu_custom_call.1} parent=15 // pred_check
          %p212 = pneg %p115
        $region26: #{tpu_custom_call.1} parent=15 // pred_check_branch
          %214 = sbr.rel (%p212) target = $region28
        $region27: #{tpu_custom_call.1} parent=15 // pred_region
          %s215 = sand.u32 %s18, 1
          %s216 = scalar_lea.sflag [#allocation9], %s215
          %s217 = sand.u32 %s105, 1
          %s218 = smul.addr %s217, 16
          %s219 = scalar_lea.vmem [#allocation10], %s218
          %s221 = ssub.s32 256, 256
          %222 = vsyncadd %s216, %s221
          %s223 = smul.addr %s25, 4
          %s224 = sadd.s32 %s27, %s223
          %s225 = smul.addr %s224, 64
          %s226 = scalar_lea.hbm %s2, %s225
          %s227 = sshll.u32 %s219, 4
          %s228 = int_to_ptr.vmem [resolvable:$true] %s227
          %233 = dma.hbm_to_vmem [thread:$0]  %s226, 256, %s228, %s216, 64, 64, 4
        $region28: #{tpu_custom_call.1} parent=15 // pred_fallthru
          _
      $region16: #{tpu_custom_call.1} parent=5 // pred_fallthru
        _
      %p234 = scmp.le.s32.totalorder 1, %s18
      %p235 = scmp.lt.s32.totalorder %s18, 3
      %p236 = pnand %p234, %p235
      %p237 = pneg %p236
      // Predicated region
      $region29: #{tpu_custom_call.1} parent=5 // pred_check
        _
      $region30: #{tpu_custom_call.1} parent=5 // pred_check_branch
        %239 = sbr.rel (%p236) target = $region32
      $region31: #{tpu_custom_call.1} parent=5 // pred_region
        %s240 = ssub.s32 %s18, 1
        %s241 = sand.u32 %s52, 1
        %s242 = scalar_lea.sflag [#allocation6], %s241
        %s243 = sand.u32 %s52, 1
        %s244 = smul.addr %s243, 16
        %s245 = scalar_lea.vmem [#allocation5], %s244
        // Predicated region
        $region33: #{tpu_custom_call.1} parent=31 // pred_check
          %p246 = pneg %p65
        $region34: #{tpu_custom_call.1} parent=31 // pred_check_branch
          %248 = sbr.rel (%p246) target = $region36
        $region35: #{tpu_custom_call.1} parent=31 // pred_region
          %249 = dma.done %s242, 256
        $region36: #{tpu_custom_call.1} parent=31 // pred_fallthru
          _
        %s250 = sand.u32 %s23, 1
        %s251 = scalar_lea.sflag [#allocation9], %s250
        %s252 = sand.u32 %s80, 1
        %s253 = smul.addr %s252, 16
        %s254 = scalar_lea.vmem [#allocation8], %s253
        // Predicated region
        $region37: #{tpu_custom_call.1} parent=31 // pred_check
          %p255 = pneg %p93
        $region38: #{tpu_custom_call.1} parent=31 // pred_check_branch
          %257 = sbr.rel (%p255) target = $region40
        $region39: #{tpu_custom_call.1} parent=31 // pred_region
          %258 = dma.done %s251, 256
        $region40: #{tpu_custom_call.1} parent=31 // pred_fallthru
          _
        %s259 = sand.u32 %s23, 1
        %s260 = scalar_lea.sflag [#allocation9], %s259
        %s261 = sand.u32 %s108, 1
        %s262 = smul.addr %s261, 16
        %s263 = scalar_lea.vmem [#allocation10], %s262
        // Predicated region
        $region41: #{tpu_custom_call.1} parent=31 // pred_check
          %p264 = pneg %p121
        $region42: #{tpu_custom_call.1} parent=31 // pred_check_branch
          %266 = sbr.rel (%p264) target = $region44
        $region43: #{tpu_custom_call.1} parent=31 // pred_region
          %267 = dma.done %s260, 256
        $region44: #{tpu_custom_call.1} parent=31 // pred_fallthru
          _
        %s268 = sand.u32 %s52, 1
        %s269 = scalar_lea.sflag [#allocation6], %s268
        %s270 = sand.u32 %s52, 1
        %s271 = smul.addr %s270, 16
        %s272 = scalar_lea.vmem [#allocation5], %s271
        %p273 = pneg %p65
        %p274 = pneg %p62
        %s275 = sand.u32 %s23, 1
        %s276 = scalar_lea.sflag [#allocation9], %s275
        %s277 = sand.u32 %s80, 1
        %s278 = smul.addr %s277, 16
        %s279 = scalar_lea.vmem [#allocation8], %s278
        %p280 = pneg %p93
        %p281 = pneg %p90
        %s282 = sand.u32 %s23, 1
        %s283 = scalar_lea.sflag [#allocation9], %s282
        %s284 = sand.u32 %s108, 1
        %s285 = smul.addr %s284, 16
        %s286 = scalar_lea.vmem [#allocation10], %s285
        %p287 = pneg %p121
        %p288 = pneg %p118
        %p289 = pneg %p149
        %p290 = pneg %p146
        %s291 = sand.u32 %s136, 1
        %s292 = scalar_lea.sflag [#allocation7], %s291
        %s293 = sand.u32 %s136, 1
        %s294 = smul.addr %s293, 16
        %s295 = scalar_lea.vmem [#allocation11], %s294
        %p297 = scmp.eq.s32.totalorder %s30, 0
        // Predicated region
        $region45: #{tpu_custom_call.1} parent=31 // pred_check
          %p298 = pneg %p297
        $region46: #{tpu_custom_call.1} parent=31 // pred_check_branch
          %300 = sbr.rel (%p298) target = $region48
        $region47: #{tpu_custom_call.1} parent=31 // pred_region
          %vm301 = vcmask 7168
          %302 = vst.msk [vmem:[#allocation2] sm:$0xff] %vm301, -inf
          %303 = vst.msk [vmem:[#allocation2 + $0x8] sm:$0xff] %vm301, -inf
          %304 = vst.msk [vmem:[#allocation2 + $0x10] sm:$0xff] %vm301, -inf
          %305 = vst.msk [vmem:[#allocation2 + $0x18] sm:$0xff] %vm301, -inf
          %306 = vst.msk [vmem:[#allocation3] sm:$0xff] %vm301, 0.0
          %307 = vst.msk [vmem:[#allocation3 + $0x8] sm:$0xff] %vm301, 0.0
          %308 = vst.msk [vmem:[#allocation3 + $0x10] sm:$0xff] %vm301, 0.0
          %309 = vst.msk [vmem:[#allocation3 + $0x18] sm:$0xff] %vm301, 0.0
          %vm310 = vcmask 130048
          %311 = vst.msk [vmem:[#allocation4] sm:$0xff] %vm310, 0.0
          %312 = vst.msk [vmem:[#allocation4 + $0x8] sm:$0xff] %vm310, 0.0
          %313 = vst.msk [vmem:[#allocation4 + $0x10] sm:$0xff] %vm310, 0.0
          %314 = vst.msk [vmem:[#allocation4 + $0x18] sm:$0xff] %vm310, 0.0
        $region48: #{tpu_custom_call.1} parent=31 // pred_fallthru
          _
        %s315 = smul.u32 %s30, 8
        %s316 = smul.u32 %s29, 8
        %s317 = sadd.s32 %s316, 7
        %p318 = scmp.le.s32.totalorder %s315, %s317
        // Predicated region
        $region49: #{tpu_custom_call.1} parent=31 // pred_check
          %p319 = pneg %p318
        $region50: #{tpu_custom_call.1} parent=31 // pred_check_branch
          %321 = sbr.rel (%p319) target = $region52
        $region51: #{tpu_custom_call.1} parent=31 // pred_region
          %v322 = vld [vmem:[%s245] sm:$0xf]
          %v323 = vld [vmem:[%s245 + $0x4] sm:$0xf]
          %v324 = vld [vmem:[%s245 + $0x8] sm:$0xf]
          %v325 = vld [vmem:[%s245 + $0xc] sm:$0xf]
          %v326 = vld [vmem:[%s254] sm:$0xf]
          %v327 = vld [vmem:[%s254 + $0x4] sm:$0xf]
          %v328 = vld [vmem:[%s254 + $0x8] sm:$0xf]
          %v329 = vld [vmem:[%s254 + $0xc] sm:$0xf]
          %v330 = vld [vmem:[%s263] sm:$0xf]
          %v331 = vld [vmem:[%s263 + $0x4] sm:$0xf]
          %v332 = vld [vmem:[%s263 + $0x8] sm:$0xf]
          %v333 = vld [vmem:[%s263 + $0xc] sm:$0xf]
          %vm334 = vcmask 130048
          %v336 = vsel %vm334, %v322, 0
          %v339 = vsel %vm334, %v326, 0
          %341 = vmatprep.subr.bf16.mxu0 0
          %342 = vmatpush1.bf16.xpose.msra.mxu0 %v339
          %343 = vmatprep.subr.bf16.mxu0 0
          %344 = vmatpush1.bf16.xpose.msra.mxu0 0
          %345 = vmatprep.subr.bf16.mxu0 0
          %346 = vmatpush1.bf16.xpose.msra.mxu0 0
          %347 = vmatprep.subr.bf16.mxu0 0
          %348 = vmatpush1.bf16.xpose.msra.mxu0 0
          %349 = vmatprep.subr.bf16.mxu0 0
          %350 = vmatpush1.bf16.xpose.msra.mxu0 0
          %351 = vmatprep.subr.bf16.mxu0 0
          %352 = vmatpush1.bf16.xpose.msra.mxu0 0
          %353 = vmatprep.subr.bf16.mxu0 0
          %354 = vmatpush1.bf16.xpose.msra.mxu0 0
          %355 = vmatprep.subr.bf16.mxu0 0
          %356 = vmatpush1.bf16.xpose.msra.mxu0 0
          %357 = vmatprep.subr.bf16.mxu0 0
          %358 = vmatpush1.bf16.xpose.msra.mxu0 0
          %359 = vmatprep.subr.bf16.mxu0 0
          %360 = vmatpush1.bf16.xpose.msra.mxu0 0
          %361 = vmatprep.subr.bf16.mxu0 0
          %362 = vmatpush1.bf16.xpose.msra.mxu0 0
          %363 = vmatprep.subr.bf16.mxu0 0
          %364 = vmatpush1.bf16.xpose.msra.mxu0 0
          %365 = vmatprep.subr.bf16.mxu0 0
          %366 = vmatpush1.bf16.xpose.msra.mxu0 0
          %367 = vmatprep.subr.bf16.mxu0 0
          %368 = vmatpush1.bf16.xpose.msra.mxu0 0
          %369 = vmatprep.subr.bf16.mxu0 0
          %370 = vmatpush1.bf16.xpose.msra.mxu0 0
          %371 = vmatprep.subr.bf16.mxu0 0
          %372 = vmatpush1.bf16.xpose.msra.mxu0 0
          %373 = vmatprep.mubr.bf16.mxu0 0
          %374 = vmatmul.mubr.bf16.gmra.mrb[0].mxu0 %v336
          %v375 = vpop.f32.mrb[0].mxu0
          %v376 = vadd.f32 0.0, %v375
          %v377 = vpop.f32.mrb[0].mxu0
          %v378 = vpop.f32.mrb[0].mxu0
          %v379 = vpop.f32.mrb[0].mxu0
          %380 = vdwg.mxu0
          %v382 = vsel %vm334, %v323, 0
          %v385 = vsel %vm334, %v327, 0
          %387 = vmatprep.subr.bf16.mxu0 0
          %388 = vmatpush1.bf16.xpose.msra.mxu0 %v385
          %389 = vmatprep.subr.bf16.mxu0 0
          %390 = vmatpush1.bf16.xpose.msra.mxu0 0
          %391 = vmatprep.subr.bf16.mxu0 0
          %392 = vmatpush1.bf16.xpose.msra.mxu0 0
          %393 = vmatprep.subr.bf16.mxu0 0
          %394 = vmatpush1.bf16.xpose.msra.mxu0 0
          %395 = vmatprep.subr.bf16.mxu0 0
          %396 = vmatpush1.bf16.xpose.msra.mxu0 0
          %397 = vmatprep.subr.bf16.mxu0 0
          %398 = vmatpush1.bf16.xpose.msra.mxu0 0
          %399 = vmatprep.subr.bf16.mxu0 0
          %400 = vmatpush1.bf16.xpose.msra.mxu0 0
          %401 = vmatprep.subr.bf16.mxu0 0
          %402 = vmatpush1.bf16.xpose.msra.mxu0 0
          %403 = vmatprep.subr.bf16.mxu0 0
          %404 = vmatpush1.bf16.xpose.msra.mxu0 0
          %405 = vmatprep.subr.bf16.mxu0 0
          %406 = vmatpush1.bf16.xpose.msra.mxu0 0
          %407 = vmatprep.subr.bf16.mxu0 0
          %408 = vmatpush1.bf16.xpose.msra.mxu0 0
          %409 = vmatprep.subr.bf16.mxu0 0
          %410 = vmatpush1.bf16.xpose.msra.mxu0 0
          %411 = vmatprep.subr.bf16.mxu0 0
          %412 = vmatpush1.bf16.xpose.msra.mxu0 0
          %413 = vmatprep.subr.bf16.mxu0 0
          %414 = vmatpush1.bf16.xpose.msra.mxu0 0
          %415 = vmatprep.subr.bf16.mxu0 0
          %416 = vmatpush1.bf16.xpose.msra.mxu0 0
          %417 = vmatprep.subr.bf16.mxu0 0
          %418 = vmatpush1.bf16.xpose.msra.mxu0 0
          %419 = vmatprep.mubr.bf16.mxu0 0
          %420 = vmatmul.mubr.bf16.gmra.mrb[0].mxu0 %v382
          %v421 = vpop.f32.mrb[0].mxu0
          %v422 = vadd.f32 0.0, %v421
          %v423 = vpop.f32.mrb[0].mxu0
          %v424 = vpop.f32.mrb[0].mxu0
          %v425 = vpop.f32.mrb[0].mxu0
          %426 = vdwg.mxu0
          %v428 = vsel %vm334, %v324, 0
          %v431 = vsel %vm334, %v328, 0
          %433 = vmatprep.subr.bf16.mxu0 0
          %434 = vmatpush1.bf16.xpose.msra.mxu0 %v431
          %435 = vmatprep.subr.bf16.mxu0 0
          %436 = vmatpush1.bf16.xpose.msra.mxu0 0
          %437 = vmatprep.subr.bf16.mxu0 0
          %438 = vmatpush1.bf16.xpose.msra.mxu0 0
          %439 = vmatprep.subr.bf16.mxu0 0
          %440 = vmatpush1.bf16.xpose.msra.mxu0 0
          %441 = vmatprep.subr.bf16.mxu0 0
          %442 = vmatpush1.bf16.xpose.msra.mxu0 0
          %443 = vmatprep.subr.bf16.mxu0 0
          %444 = vmatpush1.bf16.xpose.msra.mxu0 0
          %445 = vmatprep.subr.bf16.mxu0 0
          %446 = vmatpush1.bf16.xpose.msra.mxu0 0
          %447 = vmatprep.subr.bf16.mxu0 0
          %448 = vmatpush1.bf16.xpose.msra.mxu0 0
          %449 = vmatprep.subr.bf16.mxu0 0
          %450 = vmatpush1.bf16.xpose.msra.mxu0 0
          %451 = vmatprep.subr.bf16.mxu0 0
          %452 = vmatpush1.bf16.xpose.msra.mxu0 0
          %453 = vmatprep.subr.bf16.mxu0 0
          %454 = vmatpush1.bf16.xpose.msra.mxu0 0
          %455 = vmatprep.subr.bf16.mxu0 0
          %456 = vmatpush1.bf16.xpose.msra.mxu0 0
          %457 = vmatprep.subr.bf16.mxu0 0
          %458 = vmatpush1.bf16.xpose.msra.mxu0 0
          %459 = vmatprep.subr.bf16.mxu0 0
          %460 = vmatpush1.bf16.xpose.msra.mxu0 0
          %461 = vmatprep.subr.bf16.mxu0 0
          %462 = vmatpush1.bf16.xpose.msra.mxu0 0
          %463 = vmatprep.subr.bf16.mxu0 0
          %464 = vmatpush1.bf16.xpose.msra.mxu0 0
          %465 = vmatprep.mubr.bf16.mxu0 0
          %466 = vmatmul.mubr.bf16.gmra.mrb[0].mxu0 %v428
          %v467 = vpop.f32.mrb[0].mxu0
          %v468 = vadd.f32 0.0, %v467
          %v469 = vpop.f32.mrb[0].mxu0
          %v470 = vpop.f32.mrb[0].mxu0
          %v471 = vpop.f32.mrb[0].mxu0
          %472 = vdwg.mxu0
          %v474 = vsel %vm334, %v325, 0
          %v477 = vsel %vm334, %v329, 0
          %479 = vmatprep.subr.bf16.mxu0 0
          %480 = vmatpush1.bf16.xpose.msra.mxu0 %v477
          %481 = vmatprep.subr.bf16.mxu0 0
          %482 = vmatpush1.bf16.xpose.msra.mxu0 0
          %483 = vmatprep.subr.bf16.mxu0 0
          %484 = vmatpush1.bf16.xpose.msra.mxu0 0
          %485 = vmatprep.subr.bf16.mxu0 0
          %486 = vmatpush1.bf16.xpose.msra.mxu0 0
          %487 = vmatprep.subr.bf16.mxu0 0
          %488 = vmatpush1.bf16.xpose.msra.mxu0 0
          %489 = vmatprep.subr.bf16.mxu0 0
          %490 = vmatpush1.bf16.xpose.msra.mxu0 0
          %491 = vmatprep.subr.bf16.mxu0 0
          %492 = vmatpush1.bf16.xpose.msra.mxu0 0
          %493 = vmatprep.subr.bf16.mxu0 0
          %494 = vmatpush1.bf16.xpose.msra.mxu0 0
          %495 = vmatprep.subr.bf16.mxu0 0
          %496 = vmatpush1.bf16.xpose.msra.mxu0 0
          %497 = vmatprep.subr.bf16.mxu0 0
          %498 = vmatpush1.bf16.xpose.msra.mxu0 0
          %499 = vmatprep.subr.bf16.mxu0 0
          %500 = vmatpush1.bf16.xpose.msra.mxu0 0
          %501 = vmatprep.subr.bf16.mxu0 0
          %502 = vmatpush1.bf16.xpose.msra.mxu0 0
          %503 = vmatprep.subr.bf16.mxu0 0
          %504 = vmatpush1.bf16.xpose.msra.mxu0 0
          %505 = vmatprep.subr.bf16.mxu0 0
          %506 = vmatpush1.bf16.xpose.msra.mxu0 0
          %507 = vmatprep.subr.bf16.mxu0 0
          %508 = vmatpush1.bf16.xpose.msra.mxu0 0
          %509 = vmatprep.subr.bf16.mxu0 0
          %510 = vmatpush1.bf16.xpose.msra.mxu0 0
          %511 = vmatprep.mubr.bf16.mxu0 0
          %512 = vmatmul.mubr.bf16.gmra.mrb[0].mxu0 %v474
          %v513 = vpop.f32.mrb[0].mxu0
          %v514 = vadd.f32 0.0, %v513
          %v515 = vpop.f32.mrb[0].mxu0
          %v516 = vpop.f32.mrb[0].mxu0
          %v517 = vpop.f32.mrb[0].mxu0
          %518 = vdwg.mxu0
          %v519 = vmul.f32 %v376, 0.25
          %v520 = vmul.f32 %v422, 0.25
          %v521 = vmul.f32 %v468, 0.25
          %v522 = vmul.f32 %v514, 0.25
          %v523 = vlaneseq
          %v524 = vshrl.u32 %v523, 7
          %v525 = vstv %s316
          %v526 = vadd.s32 %v525, %v524
          %v527 = vlaneseq
          %v528 = vand.u32 %v527, 127
          %v529 = vstv %s315
          %v530 = vadd.s32 %v529, %v528
          %vm531 = vcmp.le.s32.totalorder %v530, %v526
          %v532 = vsel %vm531, 1, 0
          %vm533 = vcmp.eq.s32.totalorder %v532, 1
          %v534 = vsel %vm533, %v519, -1e+30
          %v535 = vsel %vm533, %v520, -1e+30
          %v536 = vsel %vm533, %v521, -1e+30
          %v537 = vsel %vm533, %v522, -1e+30
          %v538 = vld [vmem:[#allocation2] sm:$0xff]
          %v539 = vld [vmem:[#allocation2 + $0x8] sm:$0xff]
          %v540 = vld [vmem:[#allocation2 + $0x10] sm:$0xff]
          %v541 = vld [vmem:[#allocation2 + $0x18] sm:$0xff]
          %vm542 = vcmask 64512
          %v543 = vsel %vm542, %v534, -inf
          %544 = vmax.xlane.f32.xlu0 %v543
          %v545 = vpop.xlane.xlu0 %544
          %v546 = vsel %vm542, %v535, -inf
          %547 = vmax.xlane.f32.xlu0 %v546
          %v548 = vpop.xlane.xlu0 %547
          %v549 = vsel %vm542, %v536, -inf
          %550 = vmax.xlane.f32.xlu0 %v549
          %v551 = vpop.xlane.xlu0 %550
          %v552 = vsel %vm542, %v537, -inf
          %553 = vmax.xlane.f32.xlu0 %v552
          %v554 = vpop.xlane.xlu0 %553
          %v555 = vmax.f32 %v538, %v545
          %v556 = vmax.f32 %v539, %v548
          %v557 = vmax.f32 %v540, %v551
          %v558 = vmax.f32 %v541, %v554
          %v559 = vsub.f32 %v538, %v555
          %v560 = vsub.f32 %v539, %v556
          %v561 = vsub.f32 %v540, %v557
          %v562 = vsub.f32 %v541, %v558
          %v563 = vmul.f32 %v559, 1.442695
          %v564 = vpow.pop %v563
          %v565 = vmul.f32 %v560, 1.442695
          %v566 = vpow.pop %v565
          %v567 = vmul.f32 %v561, 1.442695
          %v568 = vpow.pop %v567
          %v569 = vmul.f32 %v562, 1.442695
          %v570 = vpow.pop %v569
          %572 = vset.pattern.permute.xlu0 0
          %573 = vperm.xlu0 %572, %v555
          %v574 = vpop.permute.xlu0 %573
          %577 = vset.pattern.permute.xlu0 0
          %578 = vperm.xlu0 %577, %v556
          %v579 = vpop.permute.xlu0 %578
          %582 = vset.pattern.permute.xlu0 0
          %583 = vperm.xlu0 %582, %v557
          %v584 = vpop.permute.xlu0 %583
          %587 = vset.pattern.permute.xlu0 0
          %588 = vperm.xlu0 %587, %v558
          %v589 = vpop.permute.xlu0 %588
          %v591 = vsub.f32 %v534, %v574
          %v592 = vsub.f32 %v535, %v579
          %v593 = vsub.f32 %v536, %v584
          %v594 = vsub.f32 %v537, %v589
          %v595 = vmul.f32 %v591, 1.442695
          %v596 = vpow.pop %v595
          %v597 = vmul.f32 %v592, 1.442695
          %v598 = vpow.pop %v597
          %v599 = vmul.f32 %v593, 1.442695
          %v600 = vpow.pop %v599
          %v601 = vmul.f32 %v594, 1.442695
          %v602 = vpow.pop %v601
          %v603 = vld [vmem:[#allocation3] sm:$0xff]
          %v604 = vld [vmem:[#allocation3 + $0x8] sm:$0xff]
          %v605 = vld [vmem:[#allocation3 + $0x10] sm:$0xff]
          %v606 = vld [vmem:[#allocation3 + $0x18] sm:$0xff]
          %v607 = vmul.f32 %v564, %v603
          %v608 = vmul.f32 %v566, %v604
          %v609 = vmul.f32 %v568, %v605
          %v610 = vmul.f32 %v570, %v606
          %v611 = vsel %vm542, %v596, 0.0
          %612 = vadd.xlane.f32.xlu0 %v611
          %v613 = vpop.xlane.xlu0 %612
          %v614 = vsel %vm542, %v598, 0.0
          %615 = vadd.xlane.f32.xlu0 %v614
          %v616 = vpop.xlane.xlu0 %615
          %v617 = vsel %vm542, %v600, 0.0
          %618 = vadd.xlane.f32.xlu0 %v617
          %v619 = vpop.xlane.xlu0 %618
          %v620 = vsel %vm542, %v602, 0.0
          %621 = vadd.xlane.f32.xlu0 %v620
          %v622 = vpop.xlane.xlu0 %621
          %v623 = vadd.f32 %v607, %v613
          %v624 = vadd.f32 %v608, %v616
          %v625 = vadd.f32 %v609, %v619
          %v626 = vadd.f32 %v610, %v622
          %vm627 = vcmask 7168
          %628 = vst.msk [vmem:[#allocation3] sm:$0xff] %vm627, %v623
          %629 = vst.msk [vmem:[#allocation3 + $0x8] sm:$0xff] %vm627, %v624
          %630 = vst.msk [vmem:[#allocation3 + $0x10] sm:$0xff] %vm627, %v625
          %631 = vst.msk [vmem:[#allocation3 + $0x18] sm:$0xff] %vm627, %v626
          %v632 = vld [vmem:[#allocation4] sm:$0xff]
          %v633 = vld [vmem:[#allocation4 + $0x8] sm:$0xff]
          %v634 = vld [vmem:[#allocation4 + $0x10] sm:$0xff]
          %v635 = vld [vmem:[#allocation4 + $0x18] sm:$0xff]
          %637 = vset.pattern.permute.xlu0 0
          %638 = vperm.xlu0 %637, %v564
          %v639 = vpop.permute.xlu0 %638
          %642 = vset.pattern.permute.xlu0 0
          %643 = vperm.xlu0 %642, %v566
          %v644 = vpop.permute.xlu0 %643
          %647 = vset.pattern.permute.xlu0 0
          %648 = vperm.xlu0 %647, %v568
          %v649 = vpop.permute.xlu0 %648
          %652 = vset.pattern.permute.xlu0 0
          %653 = vperm.xlu0 %652, %v570
          %v654 = vpop.permute.xlu0 %653
          %v656 = vmul.f32 %v639, %v632
          %v657 = vmul.f32 %v644, %v633
          %v658 = vmul.f32 %v649, %v634
          %v659 = vmul.f32 %v654, %v635
          %v660 = vpack.c.bf16 %v596, %v596
          %v661 = vpack.c.bf16 %v598, %v598
          %v662 = vpack.c.bf16 %v600, %v600
          %v663 = vpack.c.bf16 %v602, %v602
          %v665 = vsel %vm542, %v660, 0
          %vm667 = vcmask 1043456
          %v669 = vsel %vm667, %v330, 0
          %671 = vmatprep.subr.bf16.mxu0 0
          %672 = vmatpush1.bf16.msra.mxu0 %v669
          %673 = vmatprep.subr.bf16.mxu0 0
          %674 = vmatpush1.bf16.msra.mxu0 0
          %675 = vmatprep.subr.bf16.mxu0 0
          %676 = vmatpush1.bf16.msra.mxu0 0
          %677 = vmatprep.subr.bf16.mxu0 0
          %678 = vmatpush1.bf16.msra.mxu0 0
          %679 = vmatprep.subr.bf16.mxu0 0
          %680 = vmatpush1.bf16.msra.mxu0 0
          %681 = vmatprep.subr.bf16.mxu0 0
          %682 = vmatpush1.bf16.msra.mxu0 0
          %683 = vmatprep.subr.bf16.mxu0 0
          %684 = vmatpush1.bf16.msra.mxu0 0
          %685 = vmatprep.subr.bf16.mxu0 0
          %686 = vmatpush1.bf16.msra.mxu0 0
          %687 = vmatprep.subr.bf16.mxu0 0
          %688 = vmatpush1.bf16.msra.mxu0 0
          %689 = vmatprep.subr.bf16.mxu0 0
          %690 = vmatpush1.bf16.msra.mxu0 0
          %691 = vmatprep.subr.bf16.mxu0 0
          %692 = vmatpush1.bf16.msra.mxu0 0
          %693 = vmatprep.subr.bf16.mxu0 0
          %694 = vmatpush1.bf16.msra.mxu0 0
          %695 = vmatprep.subr.bf16.mxu0 0
          %696 = vmatpush1.bf16.msra.mxu0 0
          %697 = vmatprep.subr.bf16.mxu0 0
          %698 = vmatpush1.bf16.msra.mxu0 0
          %699 = vmatprep.subr.bf16.mxu0 0
          %700 = vmatpush1.bf16.msra.mxu0 0
          %701 = vmatprep.subr.bf16.mxu0 0
          %702 = vmatpush1.bf16.msra.mxu0 0
          %703 = vmatprep.mubr.bf16.mxu0 0
          %704 = vmatmul.mubr.bf16.gmra.mrb[0].mxu0 %v665
          %v705 = vpop.f32.mrb[0].mxu0
          %v706 = vadd.f32 0.0, %v705
          %v707 = vpop.f32.mrb[0].mxu0
          %v708 = vpop.f32.mrb[0].mxu0
          %v709 = vpop.f32.mrb[0].mxu0
          %710 = vdwg.mxu0
          %v712 = vsel %vm542, %v661, 0
          %v715 = vsel %vm667, %v331, 0
          %717 = vmatprep.subr.bf16.mxu0 0
          %718 = vmatpush1.bf16.msra.mxu0 %v715
          %719 = vmatprep.subr.bf16.mxu0 0
          %720 = vmatpush1.bf16.msra.mxu0 0
          %721 = vmatprep.subr.bf16.mxu0 0
          %722 = vmatpush1.bf16.msra.mxu0 0
          %723 = vmatprep.subr.bf16.mxu0 0
          %724 = vmatpush1.bf16.msra.mxu0 0
          %725 = vmatprep.subr.bf16.mxu0 0
          %726 = vmatpush1.bf16.msra.mxu0 0
          %727 = vmatprep.subr.bf16.mxu0 0
          %728 = vmatpush1.bf16.msra.mxu0 0
          %729 = vmatprep.subr.bf16.mxu0 0
          %730 = vmatpush1.bf16.msra.mxu0 0
          %731 = vmatprep.subr.bf16.mxu0 0
          %732 = vmatpush1.bf16.msra.mxu0 0
          %733 = vmatprep.subr.bf16.mxu0 0
          %734 = vmatpush1.bf16.msra.mxu0 0
          %735 = vmatprep.subr.bf16.mxu0 0
          %736 = vmatpush1.bf16.msra.mxu0 0
          %737 = vmatprep.subr.bf16.mxu0 0
          %738 = vmatpush1.bf16.msra.mxu0 0
          %739 = vmatprep.subr.bf16.mxu0 0
          %740 = vmatpush1.bf16.msra.mxu0 0
          %741 = vmatprep.subr.bf16.mxu0 0
          %742 = vmatpush1.bf16.msra.mxu0 0
          %743 = vmatprep.subr.bf16.mxu0 0
          %744 = vmatpush1.bf16.msra.mxu0 0
          %745 = vmatprep.subr.bf16.mxu0 0
          %746 = vmatpush1.bf16.msra.mxu0 0
          %747 = vmatprep.subr.bf16.mxu0 0
          %748 = vmatpush1.bf16.msra.mxu0 0
          %749 = vmatprep.mubr.bf16.mxu0 0
          %750 = vmatmul.mubr.bf16.gmra.mrb[0].mxu0 %v712
          %v751 = vpop.f32.mrb[0].mxu0
          %v752 = vadd.f32 0.0, %v751
          %v753 = vpop.f32.mrb[0].mxu0
          %v754 = vpop.f32.mrb[0].mxu0
          %v755 = vpop.f32.mrb[0].mxu0
          %756 = vdwg.mxu0
          %v758 = vsel %vm542, %v662, 0
          %v761 = vsel %vm667, %v332, 0
          %763 = vmatprep.subr.bf16.mxu0 0
          %764 = vmatpush1.bf16.msra.mxu0 %v761
          %765 = vmatprep.subr.bf16.mxu0 0
          %766 = vmatpush1.bf16.msra.mxu0 0
          %767 = vmatprep.subr.bf16.mxu0 0
          %768 = vmatpush1.bf16.msra.mxu0 0
          %769 = vmatprep.subr.bf16.mxu0 0
          %770 = vmatpush1.bf16.msra.mxu0 0
          %771 = vmatprep.subr.bf16.mxu0 0
          %772 = vmatpush1.bf16.msra.mxu0 0
          %773 = vmatprep.subr.bf16.mxu0 0
          %774 = vmatpush1.bf16.msra.mxu0 0
          %775 = vmatprep.subr.bf16.mxu0 0
          %776 = vmatpush1.bf16.msra.mxu0 0
          %777 = vmatprep.subr.bf16.mxu0 0
          %778 = vmatpush1.bf16.msra.mxu0 0
          %779 = vmatprep.subr.bf16.mxu0 0
          %780 = vmatpush1.bf16.msra.mxu0 0
          %781 = vmatprep.subr.bf16.mxu0 0
          %782 = vmatpush1.bf16.msra.mxu0 0
          %783 = vmatprep.subr.bf16.mxu0 0
          %784 = vmatpush1.bf16.msra.mxu0 0
          %785 = vmatprep.subr.bf16.mxu0 0
          %786 = vmatpush1.bf16.msra.mxu0 0
          %787 = vmatprep.subr.bf16.mxu0 0
          %788 = vmatpush1.bf16.msra.mxu0 0
          %789 = vmatprep.subr.bf16.mxu0 0
          %790 = vmatpush1.bf16.msra.mxu0 0
          %791 = vmatprep.subr.bf16.mxu0 0
          %792 = vmatpush1.bf16.msra.mxu0 0
          %793 = vmatprep.subr.bf16.mxu0 0
          %794 = vmatpush1.bf16.msra.mxu0 0
          %795 = vmatprep.mubr.bf16.mxu0 0
          %796 = vmatmul.mubr.bf16.gmra.mrb[0].mxu0 %v758
          %v797 = vpop.f32.mrb[0].mxu0
          %v798 = vadd.f32 0.0, %v797
          %v799 = vpop.f32.mrb[0].mxu0
          %v800 = vpop.f32.mrb[0].mxu0
          %v801 = vpop.f32.mrb[0].mxu0
          %802 = vdwg.mxu0
          %v804 = vsel %vm542, %v663, 0
          %v807 = vsel %vm667, %v333, 0
          %809 = vmatprep.subr.bf16.mxu0 0
          %810 = vmatpush1.bf16.msra.mxu0 %v807
          %811 = vmatprep.subr.bf16.mxu0 0
          %812 = vmatpush1.bf16.msra.mxu0 0
          %813 = vmatprep.subr.bf16.mxu0 0
          %814 = vmatpush1.bf16.msra.mxu0 0
          %815 = vmatprep.subr.bf16.mxu0 0
          %816 = vmatpush1.bf16.msra.mxu0 0
          %817 = vmatprep.subr.bf16.mxu0 0
          %818 = vmatpush1.bf16.msra.mxu0 0
          %819 = vmatprep.subr.bf16.mxu0 0
          %820 = vmatpush1.bf16.msra.mxu0 0
          %821 = vmatprep.subr.bf16.mxu0 0
          %822 = vmatpush1.bf16.msra.mxu0 0
          %823 = vmatprep.subr.bf16.mxu0 0
          %824 = vmatpush1.bf16.msra.mxu0 0
          %825 = vmatprep.subr.bf16.mxu0 0
          %826 = vmatpush1.bf16.msra.mxu0 0
          %827 = vmatprep.subr.bf16.mxu0 0
          %828 = vmatpush1.bf16.msra.mxu0 0
          %829 = vmatprep.subr.bf16.mxu0 0
          %830 = vmatpush1.bf16.msra.mxu0 0
          %831 = vmatprep.subr.bf16.mxu0 0
          %832 = vmatpush1.bf16.msra.mxu0 0
          %833 = vmatprep.subr.bf16.mxu0 0
          %834 = vmatpush1.bf16.msra.mxu0 0
          %835 = vmatprep.subr.bf16.mxu0 0
          %836 = vmatpush1.bf16.msra.mxu0 0
          %837 = vmatprep.subr.bf16.mxu0 0
          %838 = vmatpush1.bf16.msra.mxu0 0
          %839 = vmatprep.subr.bf16.mxu0 0
          %840 = vmatpush1.bf16.msra.mxu0 0
          %841 = vmatprep.mubr.bf16.mxu0 0
          %842 = vmatmul.mubr.bf16.gmra.mrb[0].mxu0 %v804
          %v843 = vpop.f32.mrb[0].mxu0
          %v844 = vadd.f32 0.0, %v843
          %v845 = vpop.f32.mrb[0].mxu0
          %v846 = vpop.f32.mrb[0].mxu0
          %v847 = vpop.f32.mrb[0].mxu0
          %848 = vdwg.mxu0
          %v849 = vadd.f32 %v656, %v706
          %v850 = vadd.f32 %v657, %v752
          %v851 = vadd.f32 %v658, %v798
          %v852 = vadd.f32 %v659, %v844
          %853 = vst.msk [vmem:[#allocation4] sm:$0xff] %vm334, %v849
          %854 = vst.msk [vmem:[#allocation4 + $0x8] sm:$0xff] %vm334, %v850
          %855 = vst.msk [vmem:[#allocation4 + $0x10] sm:$0xff] %vm334, %v851
          %856 = vst.msk [vmem:[#allocation4 + $0x18] sm:$0xff] %vm334, %v852
          %857 = vst.msk [vmem:[#allocation2] sm:$0xff] %vm627, %v555
          %858 = vst.msk [vmem:[#allocation2 + $0x8] sm:$0xff] %vm627, %v556
          %859 = vst.msk [vmem:[#allocation2 + $0x10] sm:$0xff] %vm627, %v557
          %860 = vst.msk [vmem:[#allocation2 + $0x18] sm:$0xff] %vm627, %v558
        $region52: #{tpu_custom_call.1} parent=31 // pred_fallthru
          _
        // Predicated region
        $region53: #{tpu_custom_call.1} parent=31 // pred_check
          %p861 = pneg %p297
        $region54: #{tpu_custom_call.1} parent=31 // pred_check_branch
          %863 = sbr.rel (%p861) target = $region56
        $region55: #{tpu_custom_call.1} parent=31 // pred_region
          %v864 = vld [vmem:[#allocation3] sm:$0xff]
          %v865 = vld [vmem:[#allocation3 + $0x8] sm:$0xff]
          %v866 = vld [vmem:[#allocation3 + $0x10] sm:$0xff]
          %v867 = vld [vmem:[#allocation3 + $0x18] sm:$0xff]
          %v868 = vrcp.pop %v864
          %v869 = vrcp.pop %v865
          %v870 = vrcp.pop %v866
          %v871 = vrcp.pop %v867
          %v872 = vld [vmem:[#allocation4] sm:$0xff]
          %v873 = vld [vmem:[#allocation4 + $0x8] sm:$0xff]
          %v874 = vld [vmem:[#allocation4 + $0x10] sm:$0xff]
          %v875 = vld [vmem:[#allocation4 + $0x18] sm:$0xff]
          %877 = vset.pattern.permute.xlu0 0
          %878 = vperm.xlu0 %877, %v868
          %v879 = vpop.permute.xlu0 %878
          %882 = vset.pattern.permute.xlu0 0
          %883 = vperm.xlu0 %882, %v869
          %v884 = vpop.permute.xlu0 %883
          %887 = vset.pattern.permute.xlu0 0
          %888 = vperm.xlu0 %887, %v870
          %v889 = vpop.permute.xlu0 %888
          %892 = vset.pattern.permute.xlu0 0
          %893 = vperm.xlu0 %892, %v871
          %v894 = vpop.permute.xlu0 %893
          %v896 = vmul.f32 %v872, %v879
          %v897 = vmul.f32 %v873, %v884
          %v898 = vmul.f32 %v874, %v889
          %v899 = vmul.f32 %v875, %v894
          %v900 = vpack.c.bf16 %v896, %v896
          %v901 = vpack.c.bf16 %v897, %v897
          %v902 = vpack.c.bf16 %v898, %v898
          %v903 = vpack.c.bf16 %v899, %v899
          %vm904 = vcmask 125952
          %905 = vst.msk [vmem:[%s295] sm:$0xf] %vm904, %v900
          %906 = vst.msk [vmem:[%s295 + $0x4] sm:$0xf] %vm904, %v901
          %907 = vst.msk [vmem:[%s295 + $0x8] sm:$0xf] %vm904, %v902
          %908 = vst.msk [vmem:[%s295 + $0xc] sm:$0xf] %vm904, %v903
        $region56: #{tpu_custom_call.1} parent=31 // pred_fallthru
          _
        %s909 = sand.u32 %s136, 1
        %s910 = scalar_lea.sflag [#allocation7], %s909
        %s911 = sand.u32 %s136, 1
        %s912 = smul.addr %s911, 16
        %s913 = scalar_lea.vmem [#allocation11], %s912
        // Predicated region
        $region57: #{tpu_custom_call.1} parent=31 // pred_check
          %p914 = pneg %p146
        $region58: #{tpu_custom_call.1} parent=31 // pred_check_branch
          %916 = sbr.rel (%p914) target = $region60
        $region59: #{tpu_custom_call.1} parent=31 // pred_region
          %s918 = ssub.s32 256, 256
          %919 = vsyncadd %s910, %s918
          %s920 = smul.addr %s28, 4
          %s921 = sadd.s32 %s29, %s920
          %s922 = smul.addr %s921, 64
          %s923 = scalar_lea.hbm %s3, %s922
          %s924 = sshll.u32 %s913, 4
          %s925 = int_to_ptr.vmem [resolvable:$true] %s924
          %930 = dma.vmem_to_hbm [thread:$0]  %s925, 256, %s923, %s910, 64, 64, 4
        $region60: #{tpu_custom_call.1} parent=31 // pred_fallthru
          _
      $region32: #{tpu_custom_call.1} parent=5 // pred_fallthru
        _
      %p931 = scmp.le.s32.totalorder 2, %s18
      // Predicated region
      $region61: #{tpu_custom_call.1} parent=5 // pred_check
        %p932 = pneg %p931
      $region62: #{tpu_custom_call.1} parent=5 // pred_check_branch
        %934 = sbr.rel (%p932) target = $region64
      $region63: #{tpu_custom_call.1} parent=5 // pred_region
        %s935 = ssub.s32 %s18, 2
        // Predicated region
        $region65: #{tpu_custom_call.1} parent=63 // pred_check
          %p936 = pneg %p152
        $region66: #{tpu_custom_call.1} parent=63 // pred_check_branch
          %938 = sbr.rel (%p936) target = $region68
        $region67: #{tpu_custom_call.1} parent=63 // pred_region
          %s939 = sand.u32 %s137, 1
          %s940 = scalar_lea.sflag [#allocation7], %s939
          %s941 = sand.u32 %s137, 1
          %s942 = smul.addr %s941, 16
          %s943 = scalar_lea.vmem [#allocation11], %s942
          %944 = dma.done %s940, 256
        $region68: #{tpu_custom_call.1} parent=63 // pred_fallthru
          _
      $region64: #{tpu_custom_call.1} parent=5 // pred_fallthru
        _
    $region6: #{tpu_custom_call.1} parent=1 // loop_footer
      %s22 = sadd.s32 1, %s18
    $region7: #{tpu_custom_call.1} parent=1 // loop_footer_branch
      %17 = sbr.rel target = $region3
    $region8: #{tpu_custom_call.1} parent=1 // loop_exit
      _
    %945 = vsyncpa [#allocation6], 1
    %s946 = scalar_lea.sflag [#allocation6], 1
    %947 = vsyncpa %s946, 1
    %948 = vsyncpa [#allocation9], 1
    %s949 = scalar_lea.sflag [#allocation9], 1
    %950 = vsyncpa %s949, 1
    %951 = vsyncpa [#allocation7], 1
    %s952 = scalar_lea.sflag [#allocation7], 1
    %953 = vsyncpa %s952, 1

</llo_original>
